<compile_context>
chip_gen: v7x
topology: tpu7x:2x2x1
jax: 0.10.0
libtpu: 0.0.40
codegen_flags: <defaults>
</compile_context>

<pallas_src>
import functools

import jax
import jax.numpy as jnp
from jax.experimental import pallas as pl
from jax.experimental.pallas import tpu as pltpu

_LANE = 128
_ABS_MAX_TILE_HW = 32768                 # review: 8192-32768 spatial tiles
_VMEM_BUDGET_BYTES = 48 * 1024 * 1024    # conservative for v7x (64 MiB phys)


def _local_block_kernel(
    x_ref,        # (C, TILE_HW)  channels on sublanes, spatial on lanes
    w_stack_ref,  # (2C, C)  rows [0:C]  = fused enc+BN+dec+BN weight
                  #          rows [C:2C] = attention conv1 weight (BN folded)
    b_stack_ref,  # (2C, 1)  matching biases
    w_a2_ref,     # (C, 1)   attention conv2 weight (BN folded)
    b_a2_ref,     # (1, 1)
    w_fc_ref,     # (O, C)
    b_fc_ref,     # (O, 1)
    pooled_ref,   # (C, 1)   output block (per batch)
    logits_ref,   # (O, 1)   output block (per batch)
    acc_ref,      # (C, 1)   VMEM scratch accumulator
    *,
    c,
    inv_hw,
    tile_hw,
    hw_valid,
    needs_mask,
):
    t = pl.program_id(1)

    @pl.when(t == 0)
    def _():
        acc_ref[...] = jnp.zeros_like(acc_ref)

    # Input stays in its HBM dtype (e.g. bf16) for the DMA; upcast in-register.
    x = x_ref[...].astype(jnp.float32)                              # (C, T)

    # One MXU pass for both x-consuming 1x1 convs, then a single fused
    # bias-add + ReLU on the stacked (2C, T) result.
    # (For C <= ~16 a VPU broadcast-MAC could replace this dot, but the kernel
    #  is HBM-bound so the MXU path is not on the critical path.)
    y = jnp.dot(w_stack_ref[...], x, preferred_element_type=jnp.float32)
    y = jnp.maximum(y + b_stack_ref[...], 0.0)                      # (2C, T)
    dec = y[:c]                                                     # (C, T)
    a1 = y[c:]                                                      # (C, T)

    # attention conv2 (C->1) + BN + Sigmoid: VPU mul + sublane reduce + EUP.
    att = jnp.sum(w_a2_ref[...] * a1, axis=0, keepdims=True)        # (1, T)
    att = jax.nn.sigmoid(att + b_a2_ref[...])                       # (1, T)

    gated = att * dec                                               # (C, T)
    if needs_mask:
        # Padded lanes would contribute sigmoid(b_a2)*relu(b_dec) != 0, so
        # mask them out of the pooled sum (static flag: no cost when unused).
        pos = t * tile_hw + jax.lax.broadcasted_iota(
            jnp.int32, (1, tile_hw), 1)
        gated = jnp.where(pos < hw_valid, gated, 0.0)

    # partial spatial sum (lane reduce), accumulated across grid axis 1
    acc_ref[...] += jnp.sum(gated, axis=1, keepdims=True)           # (C, 1)

    @pl.when(t == pl.num_programs(1) - 1)
    def _():
        pooled = acc_ref[...] * inv_hw                              # (C, 1)
        pooled_ref[...] = pooled
        logits_ref[...] = (
            jnp.dot(w_fc_ref[...], pooled, preferred_element_type=jnp.float32)
            + b_fc_ref[...]
        )


def _fold_bn(gamma, beta, mean, var, eps=1e-5):
    scale = gamma / jnp.sqrt(var + eps)
    bias = beta - mean * scale
    return scale, bias  # 1-D (c,)


def _per_column_vmem_bytes(c, in_itemsize):
    # Double-buffered x block + f32 intermediates (x cast, stacked y, dec/a1
    # slice copies, att, gated) per spatial lane column.
    return 2 * c * in_itemsize + 4 * (6 * c + 4)


def _pick_tile_hw(hw, c, in_itemsize):
    cap = _VMEM_BUDGET_BYTES // _per_column_vmem_bytes(c, in_itemsize)
    cap = max(_LANE, min(_ABS_MAX_TILE_HW, (cap // _LANE) * _LANE))
    if hw <= cap:
        return hw                      # one full-extent tile per batch
    # Prefer an exact 128-multiple divisor near the cap (no padding needed).
    t = cap
    while t >= max(_LANE, cap // 2):
        if hw % t == 0:
            return t
        t -= _LANE
    return cap                         # padded path (last tile is masked)


def local_block_forward(x_nchw, params, *, tile_hw=None):
    B, C, H, W = x_nchw.shape
    HW = H * W
    O = params["w_fc"].shape[0]
    in_itemsize = jnp.dtype(x_nchw.dtype).itemsize

    if tile_hw is None:
        tile_hw = _pick_tile_hw(HW, C, in_itemsize)
    tile_hw = int(min(tile_hw, HW))
    nt = -(-HW // tile_hw)             # ceil division
    if nt > 1 and tile_hw % _LANE != 0:
        raise ValueError("tile_hw must be a multiple of 128 when tiling H*W")
    hw_pad = nt * tile_hw
    needs_mask = hw_pad != HW

    # ---- plain-JAX glue: layout (no transpose, NO dtype upcast in HBM),
    #      BN folding, exact enc/dec fusion, weight stacking ----
    x3 = x_nchw.reshape(B, C, HW)
    if needs_mask:
        x3 = jnp.pad(x3, ((0, 0), (0, 0), (0, hw_pad - HW)))

    s_enc, b_enc = _fold_bn(*params["bn_enc"])                    # (E,)
    s_dec, b_dec = _fold_bn(*params["bn_dec"])                    # (C,)
    s_a1, b_a1 = _fold_bn(*params["bn_a1"])                       # (C,)
    s_a2, b_a2 = _fold_bn(*params["bn_a2"])                       # (1,)

    w_enc = params["w_enc"].astype(jnp.float32)                   # (E, C)
    w_dec = params["w_dec"].astype(jnp.float32)                   # (C, E)
    wd_scaled = w_dec * s_dec[:, None]                            # (C, E)
    w_encdec = wd_scaled @ (w_enc * s_enc[:, None])               # (C, C) exact
    b_encdec = wd_scaled @ b_enc + b_dec                          # (C,)

    w_a1f = params["w_a1"].astype(jnp.float32) * s_a1[:, None]    # (C, C)

    # Stack the two x-consuming matmuls into a single (2C, C) MXU pass.
    w_stack = jnp.concatenate([w_encdec, w_a1f], axis=0)          # (2C, C)
    b_stack = jnp.concatenate([b_encdec, b_a1], axis=0)[:, None]  # (2C, 1)

    w_a2c = (params["w_a2"].astype(jnp.float32) * s_a2[:, None]).T  # (C, 1)
    b_a2c = b_a2.reshape(1, 1)                                    # (1, 1)
    w_fc = params["w_fc"].astype(jnp.float32)                     # (O, C)
    b_fcc = params["b_fc"].astype(jnp.float32)[:, None]           # (O, 1)

    weights = (w_stack, b_stack, w_a2c, b_a2c, w_fc, b_fcc)

    x_spec = pl.BlockSpec((None, C, tile_hw), lambda b, t: (b, 0, t))
    const_spec = lambda arr: pl.BlockSpec(arr.shape, lambda b, t: (0, 0))
    pooled_spec = pl.BlockSpec((None, C, 1), lambda b, t: (b, 0, 0))
    logits_spec = pl.BlockSpec((None, O, 1), lambda b, t: (b, 0, 0))

    kernel = functools.partial(
        _local_block_kernel,
        c=C, inv_hw=1.0 / float(HW), tile_hw=tile_hw,
        hw_valid=HW, needs_mask=needs_mask)

    # Raise the scoped VMEM limit only when the estimate exceeds the smallest
    # per-generation default (16 MiB on v5e); stay well under v7x's 64 MiB.
    weight_bytes = 4 * sum(int(w.size) for w in weights)
    vmem_est = (tile_hw * _per_column_vmem_bytes(C, in_itemsize)
                + 2 * weight_bytes + 4 * (2 * C + O + 2))
    vmem_limit = None
    if vmem_est > 16 * 1024 * 1024:
        vmem_limit = int(min(56 * 1024 * 1024, vmem_est * 3 // 2))

    flops = int(B * hw_pad * (4 * C * C + 8 * C + 6) + B * 2 * O * C)
    bytes_accessed = int(in_itemsize * B * C * hw_pad
                         + 4 * B * (C + O) + weight_bytes)
    cost = pl.CostEstimate(flops=flops, transcendentals=int(B * hw_pad),
                           bytes_accessed=bytes_accessed)

    # TODO(synk): on v7x with B == 1 the batch ("parallel") axis cannot feed
    # both TensorCores; split the spatial reduction over a leading parallel
    # grid axis with per-core partial accumulators in that case.
    pooled3, logits3 = pl.pallas_call(
        kernel,
        out_shape=(jax.ShapeDtypeStruct((B, C, 1), jnp.float32),
                   jax.ShapeDtypeStruct((B, O, 1), jnp.float32)),
        grid_spec=pltpu.PrefetchScalarGridSpec(
            num_scalar_prefetch=0,
            grid=(B, nt),
            in_specs=[x_spec] + [const_spec(w) for w in weights],
            out_specs=(pooled_spec, logits_spec),
            scratch_shapes=[pltpu.VMEM((C, 1), jnp.float32)],
        ),
        compiler_params=pltpu.CompilerParams(
            dimension_semantics=("parallel", "arbitrary"),
            vmem_limit_bytes=vmem_limit),
        cost_estimate=cost,
    )(x3, *weights)

    return pooled3[:, :, 0], logits3[:, :, 0]


def local_block_reference(x_nchw, params):
    """Pure-JAX reference matching PyTorch eval-mode semantics (unfused)."""
    B, C, H, W = x_nchw.shape
    x_tok = jnp.transpose(x_nchw, (0, 2, 3, 1)).reshape(B, H * W, C)

    s_enc, b_enc = _fold_bn(*params["bn_enc"])
    s_dec, b_dec = _fold_bn(*params["bn_dec"])
    s_a1, b_a1 = _fold_bn(*params["bn_a1"])
    s_a2, b_a2 = _fold_bn(*params["bn_a2"])

    enc = x_tok @ params["w_enc"].T * s_enc + b_enc
    dec = jnp.maximum(enc @ params["w_dec"].T * s_dec + b_dec, 0.0)
    a1 = jnp.maximum(x_tok @ params["w_a1"].T * s_a1 + b_a1, 0.0)
    att = jax.nn.sigmoid(a1 @ params["w_a2"].T * s_a2 + b_a2)
    pooled = jnp.mean(att * dec, axis=1)                          # (B, C)
    logits = pooled @ params["w_fc"].T + params["b_fc"]
    return pooled, logits


def make_params(key, in_channels, out_channels, encoding_channels):
    ks = jax.random.split(key, 16)

    def bn(k, c):
        k1, k2, k3, k4 = jax.random.split(k, 4)
        gamma = jax.random.uniform(k1, (c,), jnp.float32, 0.5, 1.5)
        beta = 0.1 * jax.random.normal(k2, (c,), jnp.float32)
        mean = 0.1 * jax.random.normal(k3, (c,), jnp.float32)
        var = jax.random.uniform(k4, (c,), jnp.float32, 0.5, 1.5)
        return (gamma, beta, mean, var)

    C, E, O = in_channels, encoding_channels, out_channels
    return {
        "w_enc": 0.2 * jax.random.normal(ks[0], (E, C), jnp.float32),
        "bn_enc": bn(ks[1], E),
        "w_dec": 0.2 * jax.random.normal(ks[2], (C, E), jnp.float32),
        "bn_dec": bn(ks[3], C),
        "w_a1": 0.2 * jax.random.normal(ks[4], (C, C), jnp.float32),
        "bn_a1": bn(ks[5], C),
        "w_a2": 0.2 * jax.random.normal(ks[6], (1, C), jnp.float32),
        "bn_a2": bn(ks[7], 1),
        "w_fc": 0.2 * jax.random.normal(ks[8], (O, C), jnp.float32),
        "b_fc": 0.1 * jax.random.normal(ks[9], (O,), jnp.float32),
    }


if __name__ == "__main__":
    B, C_in, out_channels, encoding_channels = 2, 4, 8, 32

    key = jax.random.PRNGKey(0)
    k_x, k_x2, k_p = jax.random.split(key, 3)
    params = make_params(k_p, C_in, out_channels, encoding_channels)

    def check(x, tile_hw=None, rtol=1e-4, atol=1e-5):
        pooled, logits = local_block_forward(x, params, tile_hw=tile_hw)
        jax.block_until_ready((pooled, logits))
        x_f32 = x.astype(jnp.float32)
        pooled_ref, logits_ref = local_block_reference(x_f32, params)
        assert pooled.shape == pooled_ref.shape
        assert logits.shape == logits_ref.shape
        assert jnp.allclose(pooled, pooled_ref, rtol=rtol, atol=atol), "pooled mismatch"
        assert jnp.allclose(logits, logits_ref, rtol=rtol, atol=atol), "logits mismatch"

    # 1) multi-tile accumulation path (init / accumulate / finalize)
    x1 = jax.random.normal(k_x, (B, C_in, 16, 16), jnp.float32)
    check(x1, tile_hw=128)
    # 2) default tiling: single full-extent spatial tile per batch
    check(x1)
    # 3) padded + masked last tile (H*W = 169 is not a multiple of 128)
    x2 = jax.random.normal(k_x2, (B, C_in, 13, 13), jnp.float32)
    check(x2, tile_hw=128)
    # 4) bf16 HBM transfer path (compute still f32 inside the kernel)
    check(x1.astype(jnp.bfloat16), tile_hw=128, atol=1e-4)

    print("KERNEL_OK")
</pallas_src>

<mosaic_0001>
module attributes {stable_mosaic.version = 11 : i64} {
  func.func @_local_block_kernel(%arg0: i32, %arg1: i32, %arg2: memref<1x4x128xf32, #tpu.memory_space<vmem>>, %arg3: memref<8x4xf32, #tpu.memory_space<vmem>>, %arg4: memref<8x1xf32, #tpu.memory_space<vmem>>, %arg5: memref<4x1xf32, #tpu.memory_space<vmem>>, %arg6: memref<1x1xf32, #tpu.memory_space<vmem>>, %arg7: memref<8x4xf32, #tpu.memory_space<vmem>>, %arg8: memref<8x1xf32, #tpu.memory_space<vmem>>, %arg9: memref<1x4x1xf32, #tpu.memory_space<vmem>>, %arg10: memref<1x8x1xf32, #tpu.memory_space<vmem>>, %arg11: memref<4x1xf32, #tpu.memory_space<vmem>>) attributes {dimension_semantics = [#tpu.dimension_semantics<parallel>, #tpu.dimension_semantics<arbitrary>], iteration_bounds = array<i64: 2, 2>, scalar_prefetch = 0 : i64, scratch_operands = 1 : i64, tpu.core_type = #tpu.core_type<tc>, window_params = [{transform_indices = @transform_0, window_bounds = array<i64: 1, 4, 128>}, {pipeline_mode = #tpu.pipeline_mode<synchronous>, transform_indices = @transform_1, window_bounds = array<i64: 8, 4>}, {pipeline_mode = #tpu.pipeline_mode<synchronous>, transform_indices = @transform_2, window_bounds = array<i64: 8, 1>}, {pipeline_mode = #tpu.pipeline_mode<synchronous>, transform_indices = @transform_3, window_bounds = array<i64: 4, 1>}, {pipeline_mode = #tpu.pipeline_mode<synchronous>, transform_indices = @transform_4, window_bounds = array<i64: 1, 1>}, {pipeline_mode = #tpu.pipeline_mode<synchronous>, transform_indices = @transform_5, window_bounds = array<i64: 8, 4>}, {pipeline_mode = #tpu.pipeline_mode<synchronous>, transform_indices = @transform_6, window_bounds = array<i64: 8, 1>}, {transform_indices = @transform_7, window_bounds = array<i64: 1, 4, 1>}, {transform_indices = @transform_8, window_bounds = array<i64: 1, 8, 1>}]} {
    %c0_i32 = arith.constant 0 : i32
    %0 = arith.cmpi eq, %arg1, %c0_i32 : i32
    %1 = arith.extui %0 : i1 to i32
    %c0_i32_0 = arith.constant 0 : i32
    %2 = arith.cmpi ne, %1, %c0_i32_0 : i32
    scf.if %2 {
      %cst_20 = arith.constant 0.000000e+00 : f32
      %37 = vector.broadcast %cst_20 : f32 to vector<4x1xf32>
      %c0_21 = arith.constant 0 : index
      %c0_22 = arith.constant 0 : index
      %38 = vector.load %arg11[%c0_21, %c0_22] : memref<4x1xf32, #tpu.memory_space<vmem>>, vector<4x1xf32>
      tpu.vector_store %arg11[%c0_21, %c0_22], %37 {strides = array<i32>} : memref<4x1xf32, #tpu.memory_space<vmem>>, vector<4x1xf32>,
    } else {
    }
    %c0 = arith.constant 0 : index
    %c0_1 = arith.constant 0 : index
    %c0_2 = arith.constant 0 : index
    %3 = vector.load %arg2[%c0, %c0_1, %c0_2] : memref<1x4x128xf32, #tpu.memory_space<vmem>>, vector<1x4x128xf32>
    %4 = vector.shape_cast %3 : vector<1x4x128xf32> to vector<4x128xf32>
    %c0_3 = arith.constant 0 : index
    %c0_4 = arith.constant 0 : index
    %5 = vector.load %arg3[%c0_3, %c0_4] : memref<8x4xf32, #tpu.memory_space<vmem>>, vector<8x4xf32>
    %cst = arith.constant dense<0.000000e+00> : vector<8x128xf32>
    %6 = tpu.matmul %5, %4, %cst {dimension_numbers = #tpu.dot_dimension_numbers<[1], [0], [0], [1], [0, 0, 1, 1], [], []>} : vector<8x4xf32>, vector<4x128xf32>, vector<8x128xf32> -> vector<8x128xf32>
    %c0_5 = arith.constant 0 : index
    %c0_6 = arith.constant 0 : index
    %7 = vector.load %arg4[%c0_5, %c0_6] : memref<8x1xf32, #tpu.memory_space<vmem>>, vector<8x1xf32>
    %8 = vector.broadcast %7 : vector<8x1xf32> to vector<8x128xf32>
    %9 = arith.addf %6, %8 : vector<8x128xf32>
    %cst_7 = arith.constant 0.000000e+00 : f32
    %10 = vector.broadcast %cst_7 : f32 to vector<8x128xf32>
    %11 = arith.maximumf %9, %10 : vector<8x128xf32>
    %12 = vector.extract_strided_slice %11 {offsets = [0, 0], sizes = [4, 128], strides = [1, 1]} : vector<8x128xf32> to vector<4x128xf32>
    %13 = vector.extract_strided_slice %11 {offsets = [4, 0], sizes = [4, 128], strides = [1, 1]} : vector<8x128xf32> to vector<4x128xf32>
    %c0_8 = arith.constant 0 : index
    %c0_9 = arith.constant 0 : index
    %14 = vector.load %arg5[%c0_8, %c0_9] : memref<4x1xf32, #tpu.memory_space<vmem>>, vector<4x1xf32>
    %15 = vector.broadcast %14 : vector<4x1xf32> to vector<4x128xf32>
    %16 = arith.mulf %15, %13 : vector<4x128xf32>
    %cst_10 = arith.constant dense<0.000000e+00> : vector<128xf32>
    %17 = vector.multi_reduction <add>, %16, %cst_10 [0] : vector<4x128xf32> to vector<128xf32>
    %18 = vector.shape_cast %17 : vector<128xf32> to vector<1x128xf32>
    %c0_11 = arith.constant 0 : index
    %c0_12 = arith.constant 0 : index
    %19 = vector.load %arg6[%c0_11, %c0_12] : memref<1x1xf32, #tpu.memory_space<vmem>>, vector<1x1xf32>
    %20 = vector.broadcast %19 : vector<1x1xf32> to vector<1x128xf32>
    %21 = arith.addf %18, %20 : vector<1x128xf32>
    %22 = arith.negf %21 : vector<1x128xf32>
    %23 = math.exp %22 : vector<1x128xf32>
    %cst_13 = arith.constant 1.000000e+00 : f32
    %24 = vector.broadcast %cst_13 : f32 to vector<1x128xf32>
    %25 = arith.addf %24, %23 : vector<1x128xf32>
    %26 = arith.divf %24, %25 : vector<1x128xf32>
    %27 = vector.broadcast %26 : vector<1x128xf32> to vector<4x128xf32>
    %28 = arith.mulf %27, %12 : vector<4x128xf32>
    %c0_14 = arith.constant 0 : index
    %c0_15 = arith.constant 0 : index
    %29 = vector.load %arg11[%c0_14, %c0_15] : memref<4x1xf32, #tpu.memory_space<vmem>>, vector<4x1xf32>
    %cst_16 = arith.constant dense<0.000000e+00> : vector<4xf32>
    %30 = vector.multi_reduction <add>, %28, %cst_16 [1] : vector<4x128xf32> to vector<4xf32>
    %31 = vector.shape_cast %30 : vector<4xf32> to vector<4x1xf32>
    %32 = arith.addf %29, %31 : vector<4x1xf32>
    %c0_17 = arith.constant 0 : index
    %c0_18 = arith.constant 0 : index
    %33 = vector.load %arg11[%c0_17, %c0_18] : memref<4x1xf32, #tpu.memory_space<vmem>>, vector<4x1xf32>
    tpu.vector_store %arg11[%c0_17, %c0_18], %32 {strides = array<i32>} : memref<4x1xf32, #tpu.memory_space<vmem>>, vector<4x1xf32>,
    %c1_i32 = arith.constant 1 : i32
    %34 = arith.cmpi eq, %arg1, %c1_i32 : i32
    %35 = arith.extui %34 : i1 to i32
    %c0_i32_19 = arith.constant 0 : i32
    %36 = arith.cmpi ne, %35, %c0_i32_19 : i32
    scf.if %36 {
      %c0_20 = arith.constant 0 : index
      %c0_21 = arith.constant 0 : index
      %37 = vector.load %arg11[%c0_20, %c0_21] : memref<4x1xf32, #tpu.memory_space<vmem>>, vector<4x1xf32>
      %cst_22 = arith.constant 3.906250e-03 : f32
      %38 = vector.broadcast %cst_22 : f32 to vector<4x1xf32>
      %39 = arith.mulf %37, %38 : vector<4x1xf32>
      %c0_23 = arith.constant 0 : index
      %c0_24 = arith.constant 0 : index
      %c0_25 = arith.constant 0 : index
      %40 = vector.load %arg9[%c0_23, %c0_24, %c0_25] : memref<1x4x1xf32, #tpu.memory_space<vmem>>, vector<1x4x1xf32>
      %41 = vector.shape_cast %40 : vector<1x4x1xf32> to vector<4x1xf32>
      %42 = vector.shape_cast %39 : vector<4x1xf32> to vector<1x4x1xf32>
      tpu.vector_store %arg9[%c0_23, %c0_24, %c0_25], %42 {strides = array<i32>} : memref<1x4x1xf32, #tpu.memory_space<vmem>>, vector<1x4x1xf32>,
      %c0_26 = arith.constant 0 : index
      %c0_27 = arith.constant 0 : index
      %43 = vector.load %arg7[%c0_26, %c0_27] : memref<8x4xf32, #tpu.memory_space<vmem>>, vector<8x4xf32>
      %cst_28 = arith.constant dense<0.000000e+00> : vector<8x1xf32>
      %44 = tpu.matmul %43, %39, %cst_28 {dimension_numbers = #tpu.dot_dimension_numbers<[1], [0], [0], [1], [0, 0, 1, 1], [], []>} : vector<8x4xf32>, vector<4x1xf32>, vector<8x1xf32> -> vector<8x1xf32>
      %c0_29 = arith.constant 0 : index
      %c0_30 = arith.constant 0 : index
      %45 = vector.load %arg8[%c0_29, %c0_30] : memref<8x1xf32, #tpu.memory_space<vmem>>, vector<8x1xf32>
      %46 = arith.addf %44, %45 : vector<8x1xf32>
      %c0_31 = arith.constant 0 : index
      %c0_32 = arith.constant 0 : index
      %c0_33 = arith.constant 0 : index
      %47 = vector.load %arg10[%c0_31, %c0_32, %c0_33] : memref<1x8x1xf32, #tpu.memory_space<vmem>>, vector<1x8x1xf32>
      %48 = vector.shape_cast %47 : vector<1x8x1xf32> to vector<8x1xf32>
      %49 = vector.shape_cast %46 : vector<8x1xf32> to vector<1x8x1xf32>
      tpu.vector_store %arg10[%c0_31, %c0_32, %c0_33], %49 {strides = array<i32>} : memref<1x8x1xf32, #tpu.memory_space<vmem>>, vector<1x8x1xf32>,
    } else {
    }
    return
  }
  func.func @transform_0(%arg0: i32, %arg1: i32) -> (i32, i32, i32) {
    %c0_i32 = arith.constant 0 : i32
    %c0_i32_0 = arith.constant 0 : i32
    return %arg0, %c0_i32, %arg1 : i32, i32, i32
  }
  func.func @transform_1(%arg0: i32, %arg1: i32) -> (i32, i32) {
    %c0_i32 = arith.constant 0 : i32
    %c0_i32_0 = arith.constant 0 : i32
    %c0_i32_1 = arith.constant 0 : i32
    return %c0_i32, %c0_i32_0 : i32, i32
  }
  func.func @transform_2(%arg0: i32, %arg1: i32) -> (i32, i32) {
    %c0_i32 = arith.constant 0 : i32
    %c0_i32_0 = arith.constant 0 : i32
    %c0_i32_1 = arith.constant 0 : i32
    return %c0_i32, %c0_i32_0 : i32, i32
  }
  func.func @transform_3(%arg0: i32, %arg1: i32) -> (i32, i32) {
    %c0_i32 = arith.constant 0 : i32
    %c0_i32_0 = arith.constant 0 : i32
    %c0_i32_1 = arith.constant 0 : i32
    return %c0_i32, %c0_i32_0 : i32, i32
  }
  func.func @transform_4(%arg0: i32, %arg1: i32) -> (i32, i32) {
    %c0_i32 = arith.constant 0 : i32
    %c0_i32_0 = arith.constant 0 : i32
    %c0_i32_1 = arith.constant 0 : i32
    return %c0_i32, %c0_i32_0 : i32, i32
  }
  func.func @transform_5(%arg0: i32, %arg1: i32) -> (i32, i32) {
    %c0_i32 = arith.constant 0 : i32
    %c0_i32_0 = arith.constant 0 : i32
    %c0_i32_1 = arith.constant 0 : i32
    return %c0_i32, %c0_i32_0 : i32, i32
  }
  func.func @transform_6(%arg0: i32, %arg1: i32) -> (i32, i32) {
    %c0_i32 = arith.constant 0 : i32
    %c0_i32_0 = arith.constant 0 : i32
    %c0_i32_1 = arith.constant 0 : i32
    return %c0_i32, %c0_i32_0 : i32, i32
  }
  func.func @transform_7(%arg0: i32, %arg1: i32) -> (i32, i32, i32) {
    %c0_i32 = arith.constant 0 : i32
    %c0_i32_0 = arith.constant 0 : i32
    %c0_i32_1 = arith.constant 0 : i32
    return %arg0, %c0_i32, %c0_i32_0 : i32, i32, i32
  }
  func.func @transform_8(%arg0: i32, %arg1: i32) -> (i32, i32, i32) {
    %c0_i32 = arith.constant 0 : i32
    %c0_i32_0 = arith.constant 0 : i32
    %c0_i32_1 = arith.constant 0 : i32
    return %arg0, %c0_i32, %c0_i32_0 : i32, i32, i32
  }
}

</mosaic_0001>

<llo_original>
// kernel: tpu_custom_call.1
$region0: #{tpu_custom_call.1}
  #allocation0 [shape = 'u32[]', space=smem, size = 0x4, offset = 0x4, fixed_abs, tag = 'smem constant byte address 0x4 - core index']
  #allocation1 [shape = 'u32[144,128]{1,0:T(1,128)}', space=vmem, size = 0x12000, scoped, tag = 'internal scratch']
  #allocation2 [shape = 'f32[4,1]{1,0:T(4,128)}', space=vmem, size = 0x800, scoped, tag = 'scratch operand']
  #allocation3 [shape = 'f32[1,1]{1,0:T(1,128)S(1)}', space=vmem, size = 0x200, scoped, tag = 'scoped memory for tpu_custom_call.1']
  %s0 = inlined_call_operand.vmem [shape: f32[2,4,256], index: 0, kind: input, shape index: {}]
  %s1 = inlined_call_operand.vmem [shape: f32[8,4], index: 1, kind: input, shape index: {}]
  %s2 = inlined_call_operand.vmem [shape: f32[8,1], index: 2, kind: input, shape index: {}]
  %s3 = inlined_call_operand.vmem [shape: f32[4,1], index: 3, kind: input, shape index: {}]
  %s4 = inlined_call_operand.<no memory space> [shape: f32[1,1], index: 4, kind: input, shape index: {}]
  %s5 = inlined_call_operand.vmem [shape: f32[8,4], index: 5, kind: input, shape index: {}]
  %s6 = inlined_call_operand.vmem [shape: f32[8,1], index: 6, kind: input, shape index: {}]
  %s7 = inlined_call_operand.vmem [shape: f32[2,4,1], index: 7, kind: output, shape index: {0}]
  %s8 = inlined_call_operand.vmem [shape: f32[2,8,1], index: 8, kind: output, shape index: {1}]
  %9 = xla_tuple %s7, %s8
  %s10 = sld [smem:[#allocation0]]
  $region77: #{tpu_custom_call.1} parent=0
    _
  %s12 = ssub.s32 1, %s10
  %s13 = scalar_select 0, %s12, %s10
  %v14 = vstv %s4
  %15 = vst [vmem:[#allocation3] sm:$0x1] %v14
  loop: start=0, step=1, limit=6
  $region2: #{tpu_custom_call.1} parent=0 // loop_pre_header
    _
  $region3: #{tpu_custom_call.1} parent=0 // loop_header
    %s17 = sphi 0, %s21
    %p18 = scmp.ge.s32.totalorder %s17, 6
    %s24 = sphi 0, %s36
    %s25 = sphi 0, %s32
    %s26 = sphi 0, %s24
    %s27 = sphi 0, %s25
    %s28 = sphi 0, %s26
    %s29 = sphi 0, %s27
    %s41 = sphi 0, %s43
    %s44 = sphi 0, %s41
    %s45 = sphi 0, %s44
    %s61 = sphi 0, %s45
    %s65 = sphi 0, %s65
    %s67 = sphi 0, %s65
    %s68 = sphi 0, %s67
    %s82 = sphi 0, %s68
    %s86 = sphi 0, %s86
    %s88 = sphi 0, %s86
    %s89 = sphi 0, %s88
    %s103 = sphi 0, %s89
    %s107 = sphi 0, %s107
    %s109 = sphi 0, %s107
    %s110 = sphi 0, %s109
    %s124 = sphi 0, %s110
    %s128 = sphi 0, %s128
    %s130 = sphi 0, %s128
    %s131 = sphi 0, %s130
    %s145 = sphi 0, %s131
    %s149 = sphi 0, %s149
    %s151 = sphi 0, %s149
    %s152 = sphi 0, %s151
    %s166 = sphi 0, %s152
    %s170 = sphi 0, %s170
    %s172 = sphi 0, %s170
    %s173 = sphi 0, %s172
    %s187 = sphi 0, %s173
    %s193 = sphi 0, %s195
    %s196 = sphi 0, %s193
    %s197 = sphi 0, %s196
    %s213 = sphi 0, %s197
    %s219 = sphi 0, %s221
    %s222 = sphi 0, %s219
    %s223 = sphi 0, %s222
    %s239 = sphi 0, %s223
  $region4: #{tpu_custom_call.1} parent=0 // loop_header_branch
    %20 = sbr.rel (%p18) target = $region8
  $region5: #{tpu_custom_call.1} parent=0 // loop_body
    %s22 = ssub.s32 %s17, 1
    %s23 = ssub.s32 %s17, 2
    %s30 = sadd.s32 1, %s25
    %p31 = scmp.ge.s32.totalorder %s30, 2
    %s32 = scalar_select %p31, 0, %s30
    %s33 = sadd.s32 1, %s24
    %s34 = scalar_select %p31, %s33, %s24
    %p35 = scmp.ge.s32.totalorder %s34, 2
    %s36 = scalar_select %p35, 0, %s34
    %s37 = ssub.s32 %s24, %s36
    %s38 = ssub.s32 %s25, %s32
    %s39 = sor.u32 %s37, %s38
    %p40 = scmp.eq.s32.totalorder %s39, 0
    %s42 = sadd.s32 %s41, 1
    %s43 = scalar_select %p40, %s41, %s42
    %p46 = pneg %p40
    %p47 = scmp.eq.s32.totalorder %s17, 3
    %p48 = por %p46, %p47
    %p49 = scmp.ne.s32.totalorder %s41, %s44
    %p50 = scmp.eq.s32.totalorder %s17, 0
    %p51 = por %p49, %p50
    %p52 = scmp.ne.s32.totalorder %s41, %s44
    %p53 = scmp.eq.s32.totalorder %s22, 3
    %p54 = por %p52, %p53
    %p55 = scmp.ne.s32.totalorder %s44, %s45
    %p56 = scmp.eq.s32.totalorder %s22, 0
    %p57 = por %p55, %p56
    %p58 = scmp.ne.s32.totalorder %s44, %s45
    %p59 = scmp.eq.s32.totalorder %s23, 3
    %p60 = por %p58, %p59
    %p62 = scmp.ne.s32.totalorder %s45, %s61
    %p63 = scmp.eq.s32.totalorder %s23, 0
    %p64 = por %p62, %p63
    %s66 = sadd.s32 %s65, 1
    %p69 = scmp.eq.s32.totalorder %s17, 3
    %p70 = scmp.ne.s32.totalorder %s65, %s67
    %p71 = scmp.eq.s32.totalorder %s17, 0
    %p72 = por %p70, %p71
    %p73 = scmp.ne.s32.totalorder %s65, %s67
    %p74 = scmp.eq.s32.totalorder %s22, 3
    %p75 = por %p73, %p74
    %p76 = scmp.ne.s32.totalorder %s67, %s68
    %p77 = scmp.eq.s32.totalorder %s22, 0
    %p78 = por %p76, %p77
    %p79 = scmp.ne.s32.totalorder %s67, %s68
    %p80 = scmp.eq.s32.totalorder %s23, 3
    %p81 = por %p79, %p80
    %p83 = scmp.ne.s32.totalorder %s68, %s82
    %p84 = scmp.eq.s32.totalorder %s23, 0
    %p85 = por %p83, %p84
    %s87 = sadd.s32 %s86, 1
    %p90 = scmp.eq.s32.totalorder %s17, 3
    %p91 = scmp.ne.s32.totalorder %s86, %s88
    %p92 = scmp.eq.s32.totalorder %s17, 0
    %p93 = por %p91, %p92
    %p94 = scmp.ne.s32.totalorder %s86, %s88
    %p95 = scmp.eq.s32.totalorder %s22, 3
    %p96 = por %p94, %p95
    %p97 = scmp.ne.s32.totalorder %s88, %s89
    %p98 = scmp.eq.s32.totalorder %s22, 0
    %p99 = por %p97, %p98
    %p100 = scmp.ne.s32.totalorder %s88, %s89
    %p101 = scmp.eq.s32.totalorder %s23, 3
    %p102 = por %p100, %p101
    %p104 = scmp.ne.s32.totalorder %s89, %s103
    %p105 = scmp.eq.s32.totalorder %s23, 0
    %p106 = por %p104, %p105
    %s108 = sadd.s32 %s107, 1
    %p111 = scmp.eq.s32.totalorder %s17, 3
    %p112 = scmp.ne.s32.totalorder %s107, %s109
    %p113 = scmp.eq.s32.totalorder %s17, 0
    %p114 = por %p112, %p113
    %p115 = scmp.ne.s32.totalorder %s107, %s109
    %p116 = scmp.eq.s32.totalorder %s22, 3
    %p117 = por %p115, %p116
    %p118 = scmp.ne.s32.totalorder %s109, %s110
    %p119 = scmp.eq.s32.totalorder %s22, 0
    %p120 = por %p118, %p119
    %p121 = scmp.ne.s32.totalorder %s109, %s110
    %p122 = scmp.eq.s32.totalorder %s23, 3
    %p123 = por %p121, %p122
    %p125 = scmp.ne.s32.totalorder %s110, %s124
    %p126 = scmp.eq.s32.totalorder %s23, 0
    %p127 = por %p125, %p126
    %s129 = sadd.s32 %s128, 1
    %p132 = scmp.eq.s32.totalorder %s17, 3
    %p133 = scmp.ne.s32.totalorder %s128, %s130
    %p134 = scmp.eq.s32.totalorder %s17, 0
    %p135 = por %p133, %p134
    %p136 = scmp.ne.s32.totalorder %s128, %s130
    %p137 = scmp.eq.s32.totalorder %s22, 3
    %p138 = por %p136, %p137
    %p139 = scmp.ne.s32.totalorder %s130, %s131
    %p140 = scmp.eq.s32.totalorder %s22, 0
    %p141 = por %p139, %p140
    %p142 = scmp.ne.s32.totalorder %s130, %s131
    %p143 = scmp.eq.s32.totalorder %s23, 3
    %p144 = por %p142, %p143
    %p146 = scmp.ne.s32.totalorder %s131, %s145
    %p147 = scmp.eq.s32.totalorder %s23, 0
    %p148 = por %p146, %p147
    %s150 = sadd.s32 %s149, 1
    %p153 = scmp.eq.s32.totalorder %s17, 3
    %p154 = scmp.ne.s32.totalorder %s149, %s151
    %p155 = scmp.eq.s32.totalorder %s17, 0
    %p156 = por %p154, %p155
    %p157 = scmp.ne.s32.totalorder %s149, %s151
    %p158 = scmp.eq.s32.totalorder %s22, 3
    %p159 = por %p157, %p158
    %p160 = scmp.ne.s32.totalorder %s151, %s152
    %p161 = scmp.eq.s32.totalorder %s22, 0
    %p162 = por %p160, %p161
    %p163 = scmp.ne.s32.totalorder %s151, %s152
    %p164 = scmp.eq.s32.totalorder %s23, 3
    %p165 = por %p163, %p164
    %p167 = scmp.ne.s32.totalorder %s152, %s166
    %p168 = scmp.eq.s32.totalorder %s23, 0
    %p169 = por %p167, %p168
    %s171 = sadd.s32 %s170, 1
    %p174 = scmp.eq.s32.totalorder %s17, 3
    %p175 = scmp.ne.s32.totalorder %s170, %s172
    %p176 = scmp.eq.s32.totalorder %s17, 0
    %p177 = por %p175, %p176
    %p178 = scmp.ne.s32.totalorder %s170, %s172
    %p179 = scmp.eq.s32.totalorder %s22, 3
    %p180 = por %p178, %p179
    %p181 = scmp.ne.s32.totalorder %s172, %s173
    %p182 = scmp.eq.s32.totalorder %s22, 0
    %p183 = por %p181, %p182
    %p184 = scmp.ne.s32.totalorder %s172, %s173
    %p185 = scmp.eq.s32.totalorder %s23, 3
    %p186 = por %p184, %p185
    %p188 = scmp.ne.s32.totalorder %s173, %s187
    %p189 = scmp.eq.s32.totalorder %s23, 0
    %p190 = por %p188, %p189
    %s191 = ssub.s32 %s24, %s36
    %p192 = scmp.eq.s32.totalorder %s191, 0
    %s194 = sadd.s32 %s193, 1
    %s195 = scalar_select %p192, %s193, %s194
    %p198 = pneg %p192
    %p199 = scmp.eq.s32.totalorder %s17, 3
    %p200 = por %p198, %p199
    %p201 = scmp.ne.s32.totalorder %s193, %s196
    %p202 = scmp.eq.s32.totalorder %s17, 0
    %p203 = por %p201, %p202
    %p204 = scmp.ne.s32.totalorder %s193, %s196
    %p205 = scmp.eq.s32.totalorder %s22, 3
    %p206 = por %p204, %p205
    %p207 = scmp.ne.s32.totalorder %s196, %s197
    %p208 = scmp.eq.s32.totalorder %s22, 0
    %p209 = por %p207, %p208
    %p210 = scmp.ne.s32.totalorder %s196, %s197
    %p211 = scmp.eq.s32.totalorder %s23, 3
    %p212 = por %p210, %p211
    %p214 = scmp.ne.s32.totalorder %s197, %s213
    %p215 = scmp.eq.s32.totalorder %s23, 0
    %p216 = por %p214, %p215
    %s217 = ssub.s32 %s24, %s36
    %p218 = scmp.eq.s32.totalorder %s217, 0
    %s220 = sadd.s32 %s219, 1
    %s221 = scalar_select %p218, %s219, %s220
    %p224 = pneg %p218
    %p225 = scmp.eq.s32.totalorder %s17, 3
    %p226 = por %p224, %p225
    %p227 = scmp.ne.s32.totalorder %s219, %s222
    %p228 = scmp.eq.s32.totalorder %s17, 0
    %p229 = por %p227, %p228
    %p230 = scmp.ne.s32.totalorder %s219, %s222
    %p231 = scmp.eq.s32.totalorder %s22, 3
    %p232 = por %p230, %p231
    %p233 = scmp.ne.s32.totalorder %s222, %s223
    %p234 = scmp.eq.s32.totalorder %s22, 0
    %p235 = por %p233, %p234
    %p236 = scmp.ne.s32.totalorder %s222, %s223
    %p237 = scmp.eq.s32.totalorder %s23, 3
    %p238 = por %p236, %p237
    %p240 = scmp.ne.s32.totalorder %s223, %s239
    %p241 = scmp.eq.s32.totalorder %s23, 0
    %p242 = por %p240, %p241
    %p243 = scmp.le.s32.totalorder 1, %s17
    %p244 = scmp.lt.s32.totalorder %s17, 5
    %p245 = pnand %p243, %p244
    %p246 = pneg %p245
    // Predicated region
    $region9: #{tpu_custom_call.1} parent=5 // pred_check
      _
    $region10: #{tpu_custom_call.1} parent=5 // pred_check_branch
      %248 = sbr.rel (%p245) target = $region12
    $region11: #{tpu_custom_call.1} parent=5 // pred_region
      %s249 = ssub.s32 %s17, 1
      // Predicated region
      $region13: #{tpu_custom_call.1} parent=11 // pred_check
        %p250 = pneg %p78
      $region14: #{tpu_custom_call.1} parent=11 // pred_check_branch
        %252 = sbr.rel (%p250) target = $region16
      $region15: #{tpu_custom_call.1} parent=11 // pred_region
        _
      $region16: #{tpu_custom_call.1} parent=11 // pred_fallthru
        _
      // Predicated region
      $region17: #{tpu_custom_call.1} parent=11 // pred_check
        %p253 = pneg %p99
      $region18: #{tpu_custom_call.1} parent=11 // pred_check_branch
        %255 = sbr.rel (%p253) target = $region20
      $region19: #{tpu_custom_call.1} parent=11 // pred_region
        _
      $region20: #{tpu_custom_call.1} parent=11 // pred_fallthru
        _
      // Predicated region
      $region21: #{tpu_custom_call.1} parent=11 // pred_check
        %p256 = pneg %p120
      $region22: #{tpu_custom_call.1} parent=11 // pred_check_branch
        %258 = sbr.rel (%p256) target = $region24
      $region23: #{tpu_custom_call.1} parent=11 // pred_region
        _
      $region24: #{tpu_custom_call.1} parent=11 // pred_fallthru
        _
      // Predicated region
      $region25: #{tpu_custom_call.1} parent=11 // pred_check
        %p259 = pneg %p141
      $region26: #{tpu_custom_call.1} parent=11 // pred_check_branch
        %261 = sbr.rel (%p259) target = $region28
      $region27: #{tpu_custom_call.1} parent=11 // pred_region
        _
      $region28: #{tpu_custom_call.1} parent=11 // pred_fallthru
        _
      // Predicated region
      $region29: #{tpu_custom_call.1} parent=11 // pred_check
        %p262 = pneg %p162
      $region30: #{tpu_custom_call.1} parent=11 // pred_check_branch
        %264 = sbr.rel (%p262) target = $region32
      $region31: #{tpu_custom_call.1} parent=11 // pred_region
        _
      $region32: #{tpu_custom_call.1} parent=11 // pred_fallthru
        _
      // Predicated region
      $region33: #{tpu_custom_call.1} parent=11 // pred_check
        %p265 = pneg %p183
      $region34: #{tpu_custom_call.1} parent=11 // pred_check_branch
        %267 = sbr.rel (%p265) target = $region36
      $region35: #{tpu_custom_call.1} parent=11 // pred_region
        _
      $region36: #{tpu_custom_call.1} parent=11 // pred_fallthru
        _
    $region12: #{tpu_custom_call.1} parent=5 // pred_fallthru
      _
    %p268 = scmp.lt.s32.totalorder %s17, 4
    // Predicated region
    $region37: #{tpu_custom_call.1} parent=5 // pred_check
      %p269 = pneg %p268
    $region38: #{tpu_custom_call.1} parent=5 // pred_check_branch
      %271 = sbr.rel (%p269) target = $region40
    $region39: #{tpu_custom_call.1} parent=5 // pred_region
      // Predicated region
      $region41: #{tpu_custom_call.1} parent=39 // pred_check
        %p272 = pneg %p51
      $region42: #{tpu_custom_call.1} parent=39 // pred_check_branch
        %274 = sbr.rel (%p272) target = $region44
      $region43: #{tpu_custom_call.1} parent=39 // pred_region
        %p275 = scmp.lt.s32.totalorder %s24, 1
        %s276 = scalar_select %p275, %s24, 1
        %p277 = scmp.lt.s32.totalorder %s25, 1
        %s278 = scalar_select %p277, %s25, 1
        %s279 = smul.addr %s276, 2
        %s280 = sadd.s32 %s278, %s279
        %s281 = smul.addr %s280, 4
        %s282 = scalar_lea.vmem %s0, %s281
      $region44: #{tpu_custom_call.1} parent=39 // pred_fallthru
        _
    $region40: #{tpu_custom_call.1} parent=5 // pred_fallthru
      _
    %p283 = scmp.le.s32.totalorder 1, %s17
    %p284 = scmp.lt.s32.totalorder %s17, 5
    %p285 = pnand %p283, %p284
    %p286 = pneg %p285
    // Predicated region
    $region45: #{tpu_custom_call.1} parent=5 // pred_check
      _
    $region46: #{tpu_custom_call.1} parent=5 // pred_check_branch
      %288 = sbr.rel (%p285) target = $region48
    $region47: #{tpu_custom_call.1} parent=5 // pred_region
      %s289 = ssub.s32 %s17, 1
      %p290 = scmp.lt.s32.totalorder %s26, 1
      %s291 = scalar_select %p290, %s26, 1
      %p292 = scmp.lt.s32.totalorder %s27, 1
      %s293 = scalar_select %p292, %s27, 1
      %s294 = smul.addr %s291, 2
      %s295 = sadd.s32 %s293, %s294
      %s296 = smul.addr %s295, 4
      %s297 = scalar_lea.vmem %s0, %s296
      %p298 = pneg %p57
      %p299 = pneg %p54
      %p300 = pneg %p78
      %p301 = pneg %p75
      %p302 = pneg %p99
      %p303 = pneg %p96
      %p304 = pneg %p120
      %p305 = pneg %p117
      %p306 = pneg %p141
      %p307 = pneg %p138
      %p308 = pneg %p162
      %p309 = pneg %p159
      %p310 = pneg %p183
      %p311 = pneg %p180
      %p312 = pneg %p209
      %p313 = pneg %p206
      %p314 = scmp.lt.s32.totalorder %s26, 1
      %s315 = scalar_select %p314, %s26, 1
      %s316 = smul.addr %s315, 4
      %s317 = scalar_lea.vmem %s7, %s316
      %p318 = pneg %p235
      %p319 = pneg %p232
      %p320 = scmp.lt.s32.totalorder %s26, 1
      %s321 = scalar_select %p320, %s26, 1
      %s322 = smul.addr %s321, 8
      %s323 = scalar_lea.vmem %s8, %s322
      %p324 = scmp.lt.s32.totalorder %s26, 1
      %s325 = scalar_select %p324, %s26, 1
      %p326 = scmp.lt.s32.totalorder %s27, 1
      %s327 = scalar_select %p326, %s27, 1
      %s328 = smul.addr %s325, 2
      %s329 = sadd.s32 %s327, %s328
      %s330 = smul.addr %s329, 4
      %s331 = scalar_lea.vmem %s0, %s330
      %p332 = scmp.lt.s32.totalorder %s26, 1
      %s333 = scalar_select %p332, %s26, 1
      %s334 = smul.addr %s333, 4
      %s335 = scalar_lea.vmem %s7, %s334
      %p336 = scmp.lt.s32.totalorder %s26, 1
      %s337 = scalar_select %p336, %s26, 1
      %s338 = smul.addr %s337, 8
      %s339 = scalar_lea.vmem %s8, %s338
      %p340 = scmp.eq.s32.totalorder %s27, 0
      // Predicated region
      $region49: #{tpu_custom_call.1} parent=47 // pred_check
        %p341 = pneg %p340
      $region50: #{tpu_custom_call.1} parent=47 // pred_check_branch
        %343 = sbr.rel (%p341) target = $region52
      $region51: #{tpu_custom_call.1} parent=47 // pred_region
        %vm344 = vcmask 3072
        %345 = vst.msk [vmem:[#allocation2] sm:$0xf] %vm344, 0.0
      $region52: #{tpu_custom_call.1} parent=47 // pred_fallthru
        _
      %v346 = vld [vmem:[%s331] sm:$0xf]
      %v347 = vld [vmem:[%s1] sm:$0xff]
      %v348 = vld [vmem:[%s2] sm:$0xff]
      %350 = vset.pattern.permute.xlu0 0
      %351 = vperm.xlu0 %350, %v348
      %v352 = vpop.permute.xlu0 %351
      %vm354 = vcmask 31744
      %v356 = vsel %vm354, %v347, 0
      %vm358 = vcmask 1043456
      %v360 = vsel %vm358, %v346, 0
      %362 = vmatprep.subr.mxu0 0.0
      %363 = vmatpush1.msra.mxu0 %v360
      %364 = vmatprep.subr.mxu0 0.0
      %365 = vmatpush1.msra.mxu0 0.0
      %366 = vmatprep.subr.mxu0 0.0
      %367 = vmatpush1.msra.mxu0 0.0
      %368 = vmatprep.subr.mxu0 0.0
      %369 = vmatpush1.msra.mxu0 0.0
      %370 = vmatprep.subr.mxu0 0.0
      %371 = vmatpush1.msra.mxu0 0.0
      %372 = vmatprep.subr.mxu0 0.0
      %373 = vmatpush1.msra.mxu0 0.0
      %374 = vmatprep.subr.mxu0 0.0
      %375 = vmatpush1.msra.mxu0 0.0
      %376 = vmatprep.subr.mxu0 0.0
      %377 = vmatpush1.msra.mxu0 0.0
      %378 = vmatprep.subr.mxu0 0.0
      %379 = vmatpush1.msra.mxu0 0.0
      %380 = vmatprep.subr.mxu0 0.0
      %381 = vmatpush1.msra.mxu0 0.0
      %382 = vmatprep.subr.mxu0 0.0
      %383 = vmatpush1.msra.mxu0 0.0
      %384 = vmatprep.subr.mxu0 0.0
      %385 = vmatpush1.msra.mxu0 0.0
      %386 = vmatprep.subr.mxu0 0.0
      %387 = vmatpush1.msra.mxu0 0.0
      %388 = vmatprep.subr.mxu0 0.0
      %389 = vmatpush1.msra.mxu0 0.0
      %390 = vmatprep.subr.mxu0 0.0
      %391 = vmatpush1.msra.mxu0 0.0
      %392 = vmatprep.subr.mxu0 0.0
      %393 = vmatpush1.msra.mxu0 0.0
      %394 = vmatprep.subr.mxu0 0.0
      %395 = vmatpush1.msra.mxu0 0.0
      %396 = vmatprep.subr.mxu0 0.0
      %397 = vmatpush1.msra.mxu0 0.0
      %398 = vmatprep.subr.mxu0 0.0
      %399 = vmatpush1.msra.mxu0 0.0
      %400 = vmatprep.subr.mxu0 0.0
      %401 = vmatpush1.msra.mxu0 0.0
      %402 = vmatprep.subr.mxu0 0.0
      %403 = vmatpush1.msra.mxu0 0.0
      %404 = vmatprep.subr.mxu0 0.0
      %405 = vmatpush1.msra.mxu0 0.0
      %406 = vmatprep.subr.mxu0 0.0
      %407 = vmatpush1.msra.mxu0 0.0
      %408 = vmatprep.subr.mxu0 0.0
      %409 = vmatpush1.msra.mxu0 0.0
      %410 = vmatprep.subr.mxu0 0.0
      %411 = vmatpush1.msra.mxu0 0.0
      %412 = vmatprep.subr.mxu0 0.0
      %413 = vmatpush1.msra.mxu0 0.0
      %414 = vmatprep.subr.mxu0 0.0
      %415 = vmatpush1.msra.mxu0 0.0
      %416 = vmatprep.subr.mxu0 0.0
      %417 = vmatpush1.msra.mxu0 0.0
      %418 = vmatprep.subr.mxu0 0.0
      %419 = vmatpush1.msra.mxu0 0.0
      %420 = vmatprep.subr.mxu0 0.0
      %421 = vmatpush1.msra.mxu0 0.0
      %422 = vmatprep.subr.mxu0 0.0
      %423 = vmatpush1.msra.mxu0 0.0
      %424 = vmatprep.subr.mxu0 0.0
      %425 = vmatpush1.msra.mxu0 0.0
      %426 = vmatprep.mubr.f32.mxu0 0.0
      %427 = vmatmul.mubr.f32.gmra.mrb[0].mxu0 %v356
      %v428 = vpop.f32.mrb[0].mxu0
      %v429 = vadd.f32 %v352, %v428
      %v430 = vpop.f32.mrb[0].mxu0
      %431 = vdwg.mxu0
      %v432 = vmax.f32 %v429, 0.0
      %v433 = vld [vmem:[%s3] sm:$0xf]
      %435 = vset.pattern.permute.xlu0 0
      %436 = vperm.xlu0 %435, %v433
      %v437 = vpop.permute.xlu0 %436
      %v440 = vrot.slane %v432, 4
      %v442 = vmul.f32 %v437, %v440
      %v443 = vsel %vm358, %v442, 0.0
      %v444 = vrot.slane %v443, 4
      %v445 = vadd.f32 %v443, %v444
      %v446 = vrot.slane %v445, 2
      %v447 = vadd.f32 %v445, %v446
      %v448 = vrot.slane %v447, 1
      %v449 = vadd.f32 %v447, %v448
      %v450 = vld [vmem:[#allocation3] sm:$0x1]
      %452 = vset.pattern.permute.xlu0 0
      %453 = vperm.xlu0 %452, %v450
      %v454 = vpop.permute.xlu0 %453
      %v456 = vlaneseq
      %v457 = vshrl.u32 %v456, 7
      %v458 = vsub.s32 0, %v457
      %v459 = vrot.slane %v454, %v458
      %v460 = vadd.f32 %v449, %v459
      %v461 = vxor.u32 %v460, 2147483648
      %v462 = vmul.f32 %v461, 1.442695
      %v463 = vpow.pop %v462
      %v464 = vadd.f32 %v463, 1.0
      %v465 = vrcp.pop %v464
      %v466 = vmul.f32 1.0, %v465
      %v467 = vmul.f32 %v466, %v432
      %v468 = vld [vmem:[#allocation2] sm:$0xf]
      %v469 = vsel %vm358, %v467, 0.0
      %470 = vadd.xlane.f32.xlu0 %v469
      %v471 = vpop.xlane.xlu0 %470
      %v472 = vadd.f32 %v468, %v471
      %vm473 = vcmask 3072
      %474 = vst.msk [vmem:[#allocation2] sm:$0xf] %vm473, %v472
      %p475 = scmp.eq.s32.totalorder %s27, 1
      // Predicated region
      $region53: #{tpu_custom_call.1} parent=47 // pred_check
        %p476 = pneg %p475
      $region54: #{tpu_custom_call.1} parent=47 // pred_check_branch
        %478 = sbr.rel (%p476) target = $region56
      $region55: #{tpu_custom_call.1} parent=47 // pred_region
        %v479 = vld [vmem:[#allocation2] sm:$0xf]
        %v480 = vmul.f32 %v479, 0.00390625
        %481 = vst.msk [vmem:[%s335] sm:$0xf] %vm473, %v480
        %v482 = vld [vmem:[%s5] sm:$0xff]
        %v483 = vld [vmem:[%s6] sm:$0xff]
        %v485 = vsel %vm354, %v482, 0
        %v488 = vsel %vm358, %v480, 0
        %490 = vmatprep.subr.mxu0 0.0
        %491 = vmatpush1.msra.mxu0 %v488
        %492 = vmatprep.subr.mxu0 0.0
        %493 = vmatpush1.msra.mxu0 0.0
        %494 = vmatprep.subr.mxu0 0.0
        %495 = vmatpush1.msra.mxu0 0.0
        %496 = vmatprep.subr.mxu0 0.0
        %497 = vmatpush1.msra.mxu0 0.0
        %498 = vmatprep.subr.mxu0 0.0
        %499 = vmatpush1.msra.mxu0 0.0
        %500 = vmatprep.subr.mxu0 0.0
        %501 = vmatpush1.msra.mxu0 0.0
        %502 = vmatprep.subr.mxu0 0.0
        %503 = vmatpush1.msra.mxu0 0.0
        %504 = vmatprep.subr.mxu0 0.0
        %505 = vmatpush1.msra.mxu0 0.0
        %506 = vmatprep.subr.mxu0 0.0
        %507 = vmatpush1.msra.mxu0 0.0
        %508 = vmatprep.subr.mxu0 0.0
        %509 = vmatpush1.msra.mxu0 0.0
        %510 = vmatprep.subr.mxu0 0.0
        %511 = vmatpush1.msra.mxu0 0.0
        %512 = vmatprep.subr.mxu0 0.0
        %513 = vmatpush1.msra.mxu0 0.0
        %514 = vmatprep.subr.mxu0 0.0
        %515 = vmatpush1.msra.mxu0 0.0
        %516 = vmatprep.subr.mxu0 0.0
        %517 = vmatpush1.msra.mxu0 0.0
        %518 = vmatprep.subr.mxu0 0.0
        %519 = vmatpush1.msra.mxu0 0.0
        %520 = vmatprep.subr.mxu0 0.0
        %521 = vmatpush1.msra.mxu0 0.0
        %522 = vmatprep.subr.mxu0 0.0
        %523 = vmatpush1.msra.mxu0 0.0
        %524 = vmatprep.subr.mxu0 0.0
        %525 = vmatpush1.msra.mxu0 0.0
        %526 = vmatprep.subr.mxu0 0.0
        %527 = vmatpush1.msra.mxu0 0.0
        %528 = vmatprep.subr.mxu0 0.0
        %529 = vmatpush1.msra.mxu0 0.0
        %530 = vmatprep.subr.mxu0 0.0
        %531 = vmatpush1.msra.mxu0 0.0
        %532 = vmatprep.subr.mxu0 0.0
        %533 = vmatpush1.msra.mxu0 0.0
        %534 = vmatprep.subr.mxu0 0.0
        %535 = vmatpush1.msra.mxu0 0.0
        %536 = vmatprep.subr.mxu0 0.0
        %537 = vmatpush1.msra.mxu0 0.0
        %538 = vmatprep.subr.mxu0 0.0
        %539 = vmatpush1.msra.mxu0 0.0
        %540 = vmatprep.subr.mxu0 0.0
        %541 = vmatpush1.msra.mxu0 0.0
        %542 = vmatprep.subr.mxu0 0.0
        %543 = vmatpush1.msra.mxu0 0.0
        %544 = vmatprep.subr.mxu0 0.0
        %545 = vmatpush1.msra.mxu0 0.0
        %546 = vmatprep.subr.mxu0 0.0
        %547 = vmatpush1.msra.mxu0 0.0
        %548 = vmatprep.subr.mxu0 0.0
        %549 = vmatpush1.msra.mxu0 0.0
        %550 = vmatprep.subr.mxu0 0.0
        %551 = vmatpush1.msra.mxu0 0.0
        %552 = vmatprep.subr.mxu0 0.0
        %553 = vmatpush1.msra.mxu0 0.0
        %554 = vmatprep.mubr.f32.mxu0 0.0
        %555 = vmatmul.mubr.f32.gmra.mrb[0].mxu0 %v485
        %v556 = vpop.f32.mrb[0].mxu0
        %v557 = vadd.f32 %v483, %v556
        %v558 = vpop.f32.mrb[0].mxu0
        %559 = vdwg.mxu0
        %vm560 = vcmask 7168
        %561 = vst.msk [vmem:[%s339] sm:$0xff] %vm560, %v557
      $region56: #{tpu_custom_call.1} parent=47 // pred_fallthru
        _
      %p562 = scmp.lt.s32.totalorder %s26, 1
      %s563 = scalar_select %p562, %s26, 1
      %s564 = smul.addr %s563, 4
      %s565 = scalar_lea.vmem %s7, %s564
      %p566 = scmp.lt.s32.totalorder %s26, 1
      %s567 = scalar_select %p566, %s26, 1
      %s568 = smul.addr %s567, 8
      %s569 = scalar_lea.vmem %s8, %s568
      // Predicated region
      $region57: #{tpu_custom_call.1} parent=47 // pred_check
        %p570 = pneg %p206
      $region58: #{tpu_custom_call.1} parent=47 // pred_check_branch
        %572 = sbr.rel (%p570) target = $region60
      $region59: #{tpu_custom_call.1} parent=47 // pred_region
        _
      $region60: #{tpu_custom_call.1} parent=47 // pred_fallthru
        _
      // Predicated region
      $region61: #{tpu_custom_call.1} parent=47 // pred_check
        %p573 = pneg %p232
      $region62: #{tpu_custom_call.1} parent=47 // pred_check_branch
        %575 = sbr.rel (%p573) target = $region64
      $region63: #{tpu_custom_call.1} parent=47 // pred_region
        _
      $region64: #{tpu_custom_call.1} parent=47 // pred_fallthru
        _
    $region48: #{tpu_custom_call.1} parent=5 // pred_fallthru
      _
    %p576 = scmp.le.s32.totalorder 2, %s17
    // Predicated region
    $region65: #{tpu_custom_call.1} parent=5 // pred_check
      %p577 = pneg %p576
    $region66: #{tpu_custom_call.1} parent=5 // pred_check_branch
      %579 = sbr.rel (%p577) target = $region68
    $region67: #{tpu_custom_call.1} parent=5 // pred_region
      %s580 = ssub.s32 %s17, 2
      // Predicated region
      $region69: #{tpu_custom_call.1} parent=67 // pred_check
        %p581 = pneg %p212
      $region70: #{tpu_custom_call.1} parent=67 // pred_check_branch
        %583 = sbr.rel (%p581) target = $region72
      $region71: #{tpu_custom_call.1} parent=67 // pred_region
        %p584 = scmp.lt.s32.totalorder %s28, 1
        %s585 = scalar_select %p584, %s28, 1
        %s586 = smul.addr %s585, 4
        %s587 = scalar_lea.vmem %s7, %s586
      $region72: #{tpu_custom_call.1} parent=67 // pred_fallthru
        _
      // Predicated region
      $region73: #{tpu_custom_call.1} parent=67 // pred_check
        %p588 = pneg %p238
      $region74: #{tpu_custom_call.1} parent=67 // pred_check_branch
        %590 = sbr.rel (%p588) target = $region76
      $region75: #{tpu_custom_call.1} parent=67 // pred_region
        %p591 = scmp.lt.s32.totalorder %s28, 1
        %s592 = scalar_select %p591, %s28, 1
        %s593 = smul.addr %s592, 8
        %s594 = scalar_lea.vmem %s8, %s593
      $region76: #{tpu_custom_call.1} parent=67 // pred_fallthru
        _
    $region68: #{tpu_custom_call.1} parent=5 // pred_fallthru
      _
  $region6: #{tpu_custom_call.1} parent=0 // loop_footer
    %s21 = sadd.s32 1, %s17
  $region7: #{tpu_custom_call.1} parent=0 // loop_footer_branch
    %16 = sbr.rel target = $region3
  $region8: #{tpu_custom_call.1} parent=0 // loop_exit
    _

</llo_original>
